<compile_context>
chip_gen: v6e
topology: v6e:2x2x1
jax: 0.10.0
libtpu: 0.0.40
codegen_flags: <defaults>
</compile_context>

<pallas_src>
import functools

import jax
import jax.numpy as jnp
from jax import lax
from jax.experimental import pallas as pl
from jax.experimental.pallas import tpu as pltpu


def _round_up(x, m):
    return ((x + m - 1) // m) * m


def _pick_tile(batch, tile_b):
    """Batch-tile size: multiple of 8, >= 2 grid steps when the batch allows
    (so the 'parallel' axis shards across v7x's 2 TensorCores), and preferring
    a tile that divides the (8-aligned) batch so the wrapper never needs a
    full-batch jnp.pad copy in HBM."""
    b8 = _round_up(max(batch, 1), 8)
    tb = min(tile_b, b8)
    if b8 >= 16:
        tb = min(tb, _round_up((b8 + 1) // 2, 8))
    tb = max(8, _round_up(tb, 8))
    if b8 % tb != 0:
        for cand in range(tb, max(8, tb // 2) - 1, -8):
            if b8 % cand == 0:
                return cand
    return tb


def critic_kernel(x_ref, a_ref, w1_ref, ab_ref, w2f_ref, b2_ref, out_ref):
    """Fused Critic forward for one batch tile.

    x_ref  : [TB, S]   state tile (f32, VMEM)
    a_ref  : [TB, 1]   action ids (int32, VMEM)
    w1_ref : [S, Hp]   state part of l1 weight (pre-transposed, lane-padded)
    ab_ref : [Ap, Hp]  per-action bias table: b1 + embedding @ w1_emb (padded)
    w2f_ref: [2, Hp]   folded l2 weights: row0 = wa+wb, row1 = wb
    b2_ref : [1, 1]    l2 bias scalar (SMEM)
    out_ref: [1, TB]   lane-dense output row for this tile
    """
    tb = x_ref.shape[0]
    a_pad = ab_ref.shape[0]

    # Per-action bias gather folded onto the MXU via a one-hot (tiny K = a_pad).
    onehot = (lax.broadcasted_iota(jnp.int32, (tb, a_pad), 1)
              == a_ref[...]).astype(jnp.float32)
    h1 = (jnp.dot(x_ref[...], w1_ref[...], preferred_element_type=jnp.float32)
          + jnp.dot(onehot, ab_ref[...], preferred_element_type=jnp.float32))
    pos = jnp.maximum(h1, 0.0)

    # CReLU/concat tail + Linear2, reduced over the hidden dim on the MXU.
    # dot_general contracts the LAST dim of both operands, so the result lands
    # directly as a lane-dense [1, TB] row (no masked narrow stores).
    dn = (((1,), (1,)), ((), ()))
    row = (lax.dot_general(w2f_ref[0:1, :], pos, dn,
                           preferred_element_type=jnp.float32)
           - lax.dot_general(w2f_ref[1:2, :], h1, dn,
                             preferred_element_type=jnp.float32))
    out_ref[...] = row + b2_ref[0, 0]


@functools.partial(jax.jit, static_argnames=("tile_b",))
def critic_forward(state, action, params, *, tile_b=2048):
    """state: [B, S] float32, action: [B] int32 -> [B, 1] float32."""
    B, S = state.shape
    H = params["w1"].shape[1]
    A = params["embedding"].shape[0]
    Hp = _round_up(H, 128)          # lane-dense hidden width
    Ap = _round_up(A, 8)            # sublane-aligned action table

    # ---- trace-time parameter folding (tiny, done once under jit) ----
    w1_state = params["w1"][:S, :]                        # [S, H]
    w1_emb = params["w1"][S:, :]                          # [E, H]
    act_bias = params["embedding"] @ w1_emb + params["b1"]  # [A, H]
    w2 = params["w2"][:, 0]                               # [6H]
    wa = w2[0:H] + w2[2 * H:3 * H]                        # coeff of relu(h1)
    wb = w2[H:2 * H] + w2[5 * H:6 * H]                    # coeff of relu(-h1)
    w2f = jnp.stack([wa + wb, wb], axis=0)                # [2, H]

    pad_h = Hp - H
    w1_state_p = jnp.pad(w1_state, ((0, 0), (0, pad_h)))          # [S, Hp]
    act_bias_p = jnp.pad(act_bias, ((0, Ap - A), (0, pad_h)))     # [Ap, Hp]
    w2f_p = jnp.pad(w2f, ((0, 0), (0, pad_h)))                    # [2, Hp]
    b2 = params["b2"].reshape(1, 1).astype(jnp.float32)

    # ---- batch tiling ----
    TB = _pick_tile(B, tile_b)
    G = -(-B // TB)
    Bt = G * TB

    state_f = state.astype(jnp.float32)
    action2 = action.reshape(B, 1).astype(jnp.int32)
    if Bt != B:   # only pad when the batch is ragged w.r.t. the tile
        state_f = jnp.pad(state_f, ((0, Bt - B), (0, 0)))
        action2 = jnp.pad(action2, ((0, Bt - B), (0, 0)))

    out = pl.pallas_call(
        critic_kernel,
        out_shape=jax.ShapeDtypeStruct((G, 1, TB), jnp.float32),
        grid=(G,),
        in_specs=[
            pl.BlockSpec((TB, S), lambda i: (i, 0)),            # state tile
            pl.BlockSpec((TB, 1), lambda i: (i, 0)),            # action ids
            pl.BlockSpec((S, Hp), lambda i: (0, 0)),            # w1 (replicated)
            pl.BlockSpec((Ap, Hp), lambda i: (0, 0)),           # action-bias table
            pl.BlockSpec((2, Hp), lambda i: (0, 0)),            # folded l2 weights
            pl.BlockSpec(memory_space=pltpu.MemorySpace.SMEM),  # b2 scalar
        ],
        out_specs=pl.BlockSpec((None, 1, TB), lambda i: (i, 0, 0)),
        compiler_params=pltpu.CompilerParams(
            dimension_semantics=("parallel",),
        ),
    )(state_f, action2, w1_state_p, act_bias_p, w2f_p, b2)
    return out.reshape(-1)[:B].reshape(B, 1)


def init_params(key, input_size, num_actions, embedding_size, hidden):
    """Deterministic synthetic parameters, matching nn.Linear/nn.Embedding shapes."""
    k1, k2, k3, k4, k5 = jax.random.split(key, 5)
    in1 = input_size + embedding_size
    bound1 = 1.0 / (in1 ** 0.5)
    in2 = hidden * 6
    bound2 = 1.0 / (in2 ** 0.5)
    return {
        # Linear l1: weight [hidden, in1] in PyTorch -> stored transposed [in1, hidden]
        "w1": jax.random.uniform(k1, (in1, hidden), jnp.float32, -bound1, bound1),
        "b1": jax.random.uniform(k2, (1, hidden), jnp.float32, -bound1, bound1),
        # Linear l2: weight [1, 6*hidden] -> stored transposed [6*hidden, 1]
        "w2": jax.random.uniform(k3, (in2, 1), jnp.float32, -bound2, bound2),
        "b2": jax.random.uniform(k4, (1, 1), jnp.float32, -bound2, bound2),
        # Embedding table [num_actions, embedding_size] ~ N(0, 1)
        "embedding": jax.random.normal(k5, (num_actions, embedding_size), jnp.float32),
    }


def critic_reference(state, action, params):
    """Pure-JAX reference of the original PyTorch forward (with all concats)."""
    emb = params["embedding"][action]
    x = jnp.concatenate([state, emb], axis=1)
    h1 = x @ params["w1"] + params["b1"]
    c1 = jax.nn.relu(jnp.concatenate([h1, -h1], axis=1))
    h2 = jnp.concatenate([c1, h1], axis=1)
    h3 = jax.nn.relu(jnp.concatenate([h2, -h2], axis=1))
    return h3 @ params["w2"] + params["b2"]


if __name__ == "__main__":
    # Small shapes consistent with Critic(input_size, num_actions, embedding_size, hidden)
    B, input_size, num_actions, embedding_size, hidden = 4, 16, 6, 8, 32

    key = jax.random.PRNGKey(0)
    kp, ks, ka, ks2, ka2 = jax.random.split(key, 5)

    params = init_params(kp, input_size, num_actions, embedding_size, hidden)
    state = jax.random.normal(ks, (B, input_size), jnp.float32)
    action = jax.random.randint(ka, (B,), 0, num_actions, jnp.int32)

    out = critic_forward(state, action, params)
    out = jax.block_until_ready(out)
    ref = critic_reference(state, action, params)
    assert out.shape == (B, 1), out.shape
    assert jnp.allclose(out, ref, atol=1e-4, rtol=1e-4), (out, ref)

    # Second check: multi-tile grid + ragged batch path (still small).
    B2 = 300
    state2 = jax.random.normal(ks2, (B2, input_size), jnp.float32)
    action2 = jax.random.randint(ka2, (B2,), 0, num_actions, jnp.int32)
    out2 = jax.block_until_ready(critic_forward(state2, action2, params))
    ref2 = critic_reference(state2, action2, params)
    assert out2.shape == (B2, 1), out2.shape
    assert jnp.allclose(out2, ref2, atol=1e-4, rtol=1e-4)

    print("KERNEL_OK")
</pallas_src>

<mosaic_0001>
module attributes {stable_mosaic.version = 11 : i64} {
  func.func @critic_kernel(%arg0: i32, %arg1: memref<8x16xf32, #tpu.memory_space<vmem>>, %arg2: memref<8x1xi32, #tpu.memory_space<vmem>>, %arg3: memref<16x128xf32, #tpu.memory_space<vmem>>, %arg4: memref<8x128xf32, #tpu.memory_space<vmem>>, %arg5: memref<2x128xf32, #tpu.memory_space<vmem>>, %arg6: memref<1x1xf32, #tpu.memory_space<smem>>, %arg7: memref<1x1x8xf32, #tpu.memory_space<vmem>>) attributes {dimension_semantics = [#tpu.dimension_semantics<parallel>], iteration_bounds = array<i64: 1>, scalar_prefetch = 0 : i64, scratch_operands = 0 : i64, tpu.core_type = #tpu.core_type<tc>, window_params = [{transform_indices = @transform_0, window_bounds = array<i64: 8, 16>}, {transform_indices = @transform_1, window_bounds = array<i64: 8, 1>}, {pipeline_mode = #tpu.pipeline_mode<synchronous>, transform_indices = @transform_2, window_bounds = array<i64: 16, 128>}, {pipeline_mode = #tpu.pipeline_mode<synchronous>, transform_indices = @transform_3, window_bounds = array<i64: 8, 128>}, {pipeline_mode = #tpu.pipeline_mode<synchronous>, transform_indices = @transform_4, window_bounds = array<i64: 2, 128>}, {transform_indices = @transform_5, window_bounds = array<i64: 1, 1>}, {transform_indices = @transform_6, window_bounds = array<i64: 1, 1, 8>}]} {
    %0 = tpu.iota {dimensions = array<i32: 1>} : vector<8x8xi32>
    %c0 = arith.constant 0 : index
    %c0_0 = arith.constant 0 : index
    %1 = vector.load %arg2[%c0, %c0_0] : memref<8x1xi32, #tpu.memory_space<vmem>>, vector<8x1xi32>
    %2 = vector.broadcast %1 : vector<8x1xi32> to vector<8x8xi32>
    %3 = arith.cmpi eq, %0, %2 : vector<8x8xi32>
    %4 = arith.extui %3 : vector<8x8xi1> to vector<8x8xi32>
    %5 = arith.sitofp %4 : vector<8x8xi32> to vector<8x8xf32>
    %c0_1 = arith.constant 0 : index
    %c0_2 = arith.constant 0 : index
    %6 = vector.load %arg1[%c0_1, %c0_2] : memref<8x16xf32, #tpu.memory_space<vmem>>, vector<8x16xf32>
    %c0_3 = arith.constant 0 : index
    %c0_4 = arith.constant 0 : index
    %7 = vector.load %arg3[%c0_3, %c0_4] : memref<16x128xf32, #tpu.memory_space<vmem>>, vector<16x128xf32>
    %cst = arith.constant dense<0.000000e+00> : vector<8x128xf32>
    %8 = tpu.matmul %6, %7, %cst {dimension_numbers = #tpu.dot_dimension_numbers<[1], [0], [0], [1], [0, 0, 1, 1], [], []>} : vector<8x16xf32>, vector<16x128xf32>, vector<8x128xf32> -> vector<8x128xf32>
    %c0_5 = arith.constant 0 : index
    %c0_6 = arith.constant 0 : index
    %9 = vector.load %arg4[%c0_5, %c0_6] : memref<8x128xf32, #tpu.memory_space<vmem>>, vector<8x128xf32>
    %cst_7 = arith.constant dense<0.000000e+00> : vector<8x128xf32>
    %10 = tpu.matmul %5, %9, %cst_7 {dimension_numbers = #tpu.dot_dimension_numbers<[1], [0], [0], [1], [0, 0, 1, 1], [], []>} : vector<8x8xf32>, vector<8x128xf32>, vector<8x128xf32> -> vector<8x128xf32>
    %11 = arith.addf %8, %10 : vector<8x128xf32>
    %cst_8 = arith.constant 0.000000e+00 : f32
    %12 = vector.broadcast %cst_8 : f32 to vector<8x128xf32>
    %13 = arith.maximumf %11, %12 : vector<8x128xf32>
    %c0_9 = arith.constant 0 : index
    %c0_10 = arith.constant 0 : index
    %14 = vector.load %arg5[%c0_9, %c0_10] : memref<2x128xf32, #tpu.memory_space<vmem>>, vector<1x128xf32>
    %cst_11 = arith.constant dense<0.000000e+00> : vector<1x8xf32>
    %15 = tpu.matmul %14, %13, %cst_11 {dimension_numbers = #tpu.dot_dimension_numbers<[1], [1], [0], [0], [0, 0, 1, 0], [], []>} : vector<1x128xf32>, vector<8x128xf32>, vector<1x8xf32> -> vector<1x8xf32>
    %c1 = arith.constant 1 : index
    %c0_12 = arith.constant 0 : index
    %16 = vector.load %arg5[%c1, %c0_12] : memref<2x128xf32, #tpu.memory_space<vmem>>, vector<1x128xf32>
    %cst_13 = arith.constant dense<0.000000e+00> : vector<1x8xf32>
    %17 = tpu.matmul %16, %11, %cst_13 {dimension_numbers = #tpu.dot_dimension_numbers<[1], [1], [0], [0], [0, 0, 1, 0], [], []>} : vector<1x128xf32>, vector<8x128xf32>, vector<1x8xf32> -> vector<1x8xf32>
    %18 = arith.subf %15, %17 : vector<1x8xf32>
    %c0_14 = arith.constant 0 : index
    %c0_15 = arith.constant 0 : index
    %19 = memref.load %arg6[%c0_14, %c0_15] : memref<1x1xf32, #tpu.memory_space<smem>>
    %20 = vector.broadcast %19 : f32 to vector<1x8xf32>
    %21 = arith.addf %18, %20 : vector<1x8xf32>
    %c0_16 = arith.constant 0 : index
    %c0_17 = arith.constant 0 : index
    %c0_18 = arith.constant 0 : index
    %22 = vector.load %arg7[%c0_16, %c0_17, %c0_18] : memref<1x1x8xf32, #tpu.memory_space<vmem>>, vector<1x1x8xf32>
    %23 = vector.shape_cast %22 : vector<1x1x8xf32> to vector<1x8xf32>
    %24 = vector.shape_cast %21 : vector<1x8xf32> to vector<1x1x8xf32>
    tpu.vector_store %arg7[%c0_16, %c0_17, %c0_18], %24 {strides = array<i32>} : memref<1x1x8xf32, #tpu.memory_space<vmem>>, vector<1x1x8xf32>,
    return
  }
  func.func @transform_0(%arg0: i32) -> (i32, i32) {
    %c0_i32 = arith.constant 0 : i32
    %c0_i32_0 = arith.constant 0 : i32
    return %arg0, %c0_i32 : i32, i32
  }
  func.func @transform_1(%arg0: i32) -> (i32, i32) {
    %c0_i32 = arith.constant 0 : i32
    %c0_i32_0 = arith.constant 0 : i32
    return %arg0, %c0_i32 : i32, i32
  }
  func.func @transform_2(%arg0: i32) -> (i32, i32) {
    %c0_i32 = arith.constant 0 : i32
    %c0_i32_0 = arith.constant 0 : i32
    %c0_i32_1 = arith.constant 0 : i32
    return %c0_i32, %c0_i32_0 : i32, i32
  }
  func.func @transform_3(%arg0: i32) -> (i32, i32) {
    %c0_i32 = arith.constant 0 : i32
    %c0_i32_0 = arith.constant 0 : i32
    %c0_i32_1 = arith.constant 0 : i32
    return %c0_i32, %c0_i32_0 : i32, i32
  }
  func.func @transform_4(%arg0: i32) -> (i32, i32) {
    %c0_i32 = arith.constant 0 : i32
    %c0_i32_0 = arith.constant 0 : i32
    %c0_i32_1 = arith.constant 0 : i32
    return %c0_i32, %c0_i32_0 : i32, i32
  }
  func.func @transform_5(%arg0: i32) -> (i32, i32) {
    %c0_i32 = arith.constant 0 : i32
    %c0_i32_0 = arith.constant 0 : i32
    %c0_i32_1 = arith.constant 0 : i32
    return %c0_i32, %c0_i32_0 : i32, i32
  }
  func.func @transform_6(%arg0: i32) -> (i32, i32, i32) {
    %c0_i32 = arith.constant 0 : i32
    %c0_i32_0 = arith.constant 0 : i32
    %c0_i32_1 = arith.constant 0 : i32
    return %arg0, %c0_i32, %c0_i32_0 : i32, i32, i32
  }
}

</mosaic_0001>

<llo_original>
// kernel: critic_forward.1
$region0: #{critic_forward.1}
  #allocation0 [shape = 'u32[]', space=smem, size = 0x4, offset = 0x4, fixed_abs, tag = 'smem constant byte address 0x4 - core index']
  #allocation1 [shape = 'u32[144,128]{1,0:T(1,128)}', space=vmem, size = 0x12000, scoped, tag = 'internal scratch']
  #allocation2 [shape = 'f32[1,1]{1,0:T(1,128)S(6)}', space=smem, size = 0x200, scoped, tag = 'scoped memory for critic_forward.1']
  %s0 = inlined_call_operand.vmem [shape: f32[8,16], index: 0, kind: input, shape index: {}]
  %s1 = inlined_call_operand.vmem [shape: s32[8,1], index: 1, kind: input, shape index: {}]
  %s2 = inlined_call_operand.vmem [shape: f32[16,128], index: 2, kind: input, shape index: {}]
  %s3 = inlined_call_operand.vmem [shape: f32[8,128], index: 3, kind: input, shape index: {}]
  %s4 = inlined_call_operand.vmem [shape: f32[2,128], index: 4, kind: input, shape index: {}]
  %s5 = inlined_call_operand.<no memory space> [shape: f32[1,1], index: 5, kind: input, shape index: {}]
  %s6 = inlined_call_operand.vmem [shape: f32[1,1,8], index: 6, kind: output, shape index: {}]
  %s7 = sld [smem:[#allocation0]]
  $region34: #{critic_forward.1} parent=0
    _
  %s9 = ssub.s32 1, %s7
  %s10 = scalar_select 0, %s9, %s7
  %11 = sst [smem:[#allocation2]] %s5
  // Predicated region
  $region2: #{critic_forward.1} parent=0 // pred_check
    _
  $region3: #{critic_forward.1} parent=0 // pred_check_branch
    %13 = sbr.rel (0) target = $region5
  $region4: #{critic_forward.1} parent=0 // pred_region
    _
  $region5: #{critic_forward.1} parent=0 // pred_fallthru
    _
  // Predicated region
  $region6: #{critic_forward.1} parent=0 // pred_check
    _
  $region7: #{critic_forward.1} parent=0 // pred_check_branch
    %15 = sbr.rel (0) target = $region9
  $region8: #{critic_forward.1} parent=0 // pred_region
    _
  $region9: #{critic_forward.1} parent=0 // pred_fallthru
    _
  // Predicated region
  $region10: #{critic_forward.1} parent=0 // pred_check
    _
  $region11: #{critic_forward.1} parent=0 // pred_check_branch
    %17 = sbr.rel (0) target = $region13
  $region12: #{critic_forward.1} parent=0 // pred_region
    _
  $region13: #{critic_forward.1} parent=0 // pred_fallthru
    _
  // Predicated region
  $region14: #{critic_forward.1} parent=0 // pred_check
    _
  $region15: #{critic_forward.1} parent=0 // pred_check_branch
    %19 = sbr.rel (0) target = $region17
  $region16: #{critic_forward.1} parent=0 // pred_region
    _
  $region17: #{critic_forward.1} parent=0 // pred_fallthru
    _
  // Predicated region
  $region18: #{critic_forward.1} parent=0 // pred_check
    _
  $region19: #{critic_forward.1} parent=0 // pred_check_branch
    %21 = sbr.rel (0) target = $region21
  $region20: #{critic_forward.1} parent=0 // pred_region
    _
  $region21: #{critic_forward.1} parent=0 // pred_fallthru
    _
  // Predicated region
  $region22: #{critic_forward.1} parent=0 // pred_check
    _
  $region23: #{critic_forward.1} parent=0 // pred_check_branch
    %23 = sbr.rel (0) target = $region25
  $region24: #{critic_forward.1} parent=0 // pred_region
    _
  $region25: #{critic_forward.1} parent=0 // pred_fallthru
    _
  %v24 = vlaneseq
  %v25 = vand.u32 %v24, 127
  %v26 = vld [vmem:[%s1] sm:$0xff]
  %27 = vset.pattern.permute.xlu0 0
  %28 = vperm.xlu0 %27, %v26
  %v29 = vpop.permute.xlu0 %28
  %vm30 = vcmp.eq.s32.totalorder %v25, %v29
  %v31 = vsel %vm30, 1, 0
  %v32 = vcvt.s32.f32 %v31
  %v33 = vld [vmem:[%s0] sm:$0xff]
  %v34 = vld [vmem:[%s2] sm:$0xff]
  %v35 = vld [vmem:[%s2 + $0x8] sm:$0xff]
  %v36 = vld [vmem:[%s3] sm:$0xff]
  %vm37 = vcmask 64512
  %v39 = vsel %vm37, %v32, 0
  %41 = vmatprep.subr.mxu0 0.0
  %42 = vmatpush1.msra.mxu0 0.0
  %43 = vmatprep.subr.mxu0 0.0
  %44 = vmatpush1.msra.mxu0 0.0
  %45 = vmatprep.subr.mxu0 0.0
  %46 = vmatpush1.msra.mxu0 0.0
  %47 = vmatprep.subr.mxu0 0.0
  %48 = vmatpush1.msra.mxu0 0.0
  %49 = vmatprep.subr.mxu0 0.0
  %50 = vmatpush1.msra.mxu0 0.0
  %51 = vmatprep.subr.mxu0 0.0
  %52 = vmatpush1.msra.mxu0 0.0
  %53 = vmatprep.subr.mxu0 0.0
  %54 = vmatpush1.msra.mxu0 0.0
  %55 = vmatprep.subr.mxu0 0.0
  %56 = vmatpush1.msra.mxu0 0.0
  %57 = vmatprep.subr.mxu0 0.0
  %58 = vmatpush1.msra.mxu0 0.0
  %59 = vmatprep.subr.mxu0 0.0
  %60 = vmatpush1.msra.mxu0 0.0
  %61 = vmatprep.subr.mxu0 0.0
  %62 = vmatpush1.msra.mxu0 0.0
  %63 = vmatprep.subr.mxu0 0.0
  %64 = vmatpush1.msra.mxu0 0.0
  %65 = vmatprep.subr.mxu0 0.0
  %66 = vmatpush1.msra.mxu0 0.0
  %67 = vmatprep.subr.mxu0 0.0
  %68 = vmatpush1.msra.mxu0 0.0
  %69 = vmatprep.subr.mxu0 0.0
  %70 = vmatpush1.msra.mxu0 0.0
  %71 = vmatprep.subr.mxu0 0.0
  %72 = vmatpush1.msra.mxu0 %v36
  %73 = vmatprep.subr.mxu0 0.0
  %74 = vmatpush2.msra.mxu0 0.0
  %75 = vmatprep.subr.mxu0 0.0
  %76 = vmatpush2.msra.mxu0 0.0
  %77 = vmatprep.subr.mxu0 0.0
  %78 = vmatpush2.msra.mxu0 0.0
  %79 = vmatprep.subr.mxu0 0.0
  %80 = vmatpush2.msra.mxu0 0.0
  %81 = vmatprep.subr.mxu0 0.0
  %82 = vmatpush2.msra.mxu0 0.0
  %83 = vmatprep.subr.mxu0 0.0
  %84 = vmatpush2.msra.mxu0 0.0
  %85 = vmatprep.subr.mxu0 0.0
  %86 = vmatpush2.msra.mxu0 0.0
  %87 = vmatprep.subr.mxu0 0.0
  %88 = vmatpush2.msra.mxu0 0.0
  %89 = vmatprep.subr.mxu0 0.0
  %90 = vmatpush2.msra.mxu0 0.0
  %91 = vmatprep.subr.mxu0 0.0
  %92 = vmatpush2.msra.mxu0 0.0
  %93 = vmatprep.subr.mxu0 0.0
  %94 = vmatpush2.msra.mxu0 0.0
  %95 = vmatprep.subr.mxu0 0.0
  %96 = vmatpush2.msra.mxu0 0.0
  %97 = vmatprep.subr.mxu0 0.0
  %98 = vmatpush2.msra.mxu0 0.0
  %99 = vmatprep.subr.mxu0 0.0
  %100 = vmatpush2.msra.mxu0 0.0
  %101 = vmatprep.subr.mxu0 0.0
  %102 = vmatpush2.msra.mxu0 0.0
  %103 = vmatprep.subr.mxu0 0.0
  %104 = vmatpush2.msra.mxu0 0.0
  %105 = vmatprep.mubr.f32.mxu0 0.0
  %106 = vmatmul.mubr.f32.gmra.mxu0 %v39
  %v107 = vpop.f32.mrf.mxu0
  %v108 = vadd.f32 0.0, %v107
  %v109 = vpop.f32.mrf.mxu0
  %110 = vdwg.mxu0
  %vm111 = vcmask 130048
  %v113 = vsel %vm111, %v33, 0
  %115 = vmatprep.subr.mxu0 0.0
  %116 = vmatpush1.msra.mxu0 0.0
  %117 = vmatprep.subr.mxu0 0.0
  %118 = vmatpush1.msra.mxu0 0.0
  %119 = vmatprep.subr.mxu0 0.0
  %120 = vmatpush1.msra.mxu0 0.0
  %121 = vmatprep.subr.mxu0 0.0
  %122 = vmatpush1.msra.mxu0 0.0
  %123 = vmatprep.subr.mxu0 0.0
  %124 = vmatpush1.msra.mxu0 0.0
  %125 = vmatprep.subr.mxu0 0.0
  %126 = vmatpush1.msra.mxu0 0.0
  %127 = vmatprep.subr.mxu0 0.0
  %128 = vmatpush1.msra.mxu0 0.0
  %129 = vmatprep.subr.mxu0 0.0
  %130 = vmatpush1.msra.mxu0 0.0
  %131 = vmatprep.subr.mxu0 0.0
  %132 = vmatpush1.msra.mxu0 0.0
  %133 = vmatprep.subr.mxu0 0.0
  %134 = vmatpush1.msra.mxu0 0.0
  %135 = vmatprep.subr.mxu0 0.0
  %136 = vmatpush1.msra.mxu0 0.0
  %137 = vmatprep.subr.mxu0 0.0
  %138 = vmatpush1.msra.mxu0 0.0
  %139 = vmatprep.subr.mxu0 0.0
  %140 = vmatpush1.msra.mxu0 0.0
  %141 = vmatprep.subr.mxu0 0.0
  %142 = vmatpush1.msra.mxu0 0.0
  %143 = vmatprep.subr.mxu0 0.0
  %144 = vmatpush1.msra.mxu0 %v35
  %145 = vmatprep.subr.mxu0 0.0
  %146 = vmatpush1.msra.mxu0 %v34
  %147 = vmatprep.subr.mxu0 0.0
  %148 = vmatpush2.msra.mxu0 0.0
  %149 = vmatprep.subr.mxu0 0.0
  %150 = vmatpush2.msra.mxu0 0.0
  %151 = vmatprep.subr.mxu0 0.0
  %152 = vmatpush2.msra.mxu0 0.0
  %153 = vmatprep.subr.mxu0 0.0
  %154 = vmatpush2.msra.mxu0 0.0
  %155 = vmatprep.subr.mxu0 0.0
  %156 = vmatpush2.msra.mxu0 0.0
  %157 = vmatprep.subr.mxu0 0.0
  %158 = vmatpush2.msra.mxu0 0.0
  %159 = vmatprep.subr.mxu0 0.0
  %160 = vmatpush2.msra.mxu0 0.0
  %161 = vmatprep.subr.mxu0 0.0
  %162 = vmatpush2.msra.mxu0 0.0
  %163 = vmatprep.subr.mxu0 0.0
  %164 = vmatpush2.msra.mxu0 0.0
  %165 = vmatprep.subr.mxu0 0.0
  %166 = vmatpush2.msra.mxu0 0.0
  %167 = vmatprep.subr.mxu0 0.0
  %168 = vmatpush2.msra.mxu0 0.0
  %169 = vmatprep.subr.mxu0 0.0
  %170 = vmatpush2.msra.mxu0 0.0
  %171 = vmatprep.subr.mxu0 0.0
  %172 = vmatpush2.msra.mxu0 0.0
  %173 = vmatprep.subr.mxu0 0.0
  %174 = vmatpush2.msra.mxu0 0.0
  %175 = vmatprep.subr.mxu0 0.0
  %176 = vmatpush2.msra.mxu0 0.0
  %177 = vmatprep.subr.mxu0 0.0
  %178 = vmatpush2.msra.mxu0 0.0
  %179 = vmatprep.mubr.f32.mxu0 0.0
  %180 = vmatmul.mubr.f32.gmra.mxu0 %v113
  %v181 = vpop.f32.mrf.mxu0
  %v182 = vadd.f32 %v108, %v181
  %v183 = vpop.f32.mrf.mxu0
  %184 = vdwg.mxu0
  %v185 = vmax.f32 %v182, 0.0
  %v186 = vld [vmem:[%s4] sm:$0x1]
  %187 = vmatprep.subr.mxu0 0.0
  %188 = vmatpush1.xpose.msra.mxu0 0.0
  %189 = vmatprep.subr.mxu0 0.0
  %190 = vmatpush1.xpose.msra.mxu0 0.0
  %191 = vmatprep.subr.mxu0 0.0
  %192 = vmatpush1.xpose.msra.mxu0 0.0
  %193 = vmatprep.subr.mxu0 0.0
  %194 = vmatpush1.xpose.msra.mxu0 0.0
  %195 = vmatprep.subr.mxu0 0.0
  %196 = vmatpush1.xpose.msra.mxu0 0.0
  %197 = vmatprep.subr.mxu0 0.0
  %198 = vmatpush1.xpose.msra.mxu0 0.0
  %199 = vmatprep.subr.mxu0 0.0
  %200 = vmatpush1.xpose.msra.mxu0 0.0
  %201 = vmatprep.subr.mxu0 0.0
  %202 = vmatpush1.xpose.msra.mxu0 0.0
  %203 = vmatprep.subr.mxu0 0.0
  %204 = vmatpush1.xpose.msra.mxu0 0.0
  %205 = vmatprep.subr.mxu0 0.0
  %206 = vmatpush1.xpose.msra.mxu0 0.0
  %207 = vmatprep.subr.mxu0 0.0
  %208 = vmatpush1.xpose.msra.mxu0 0.0
  %209 = vmatprep.subr.mxu0 0.0
  %210 = vmatpush1.xpose.msra.mxu0 0.0
  %211 = vmatprep.subr.mxu0 0.0
  %212 = vmatpush1.xpose.msra.mxu0 0.0
  %213 = vmatprep.subr.mxu0 0.0
  %214 = vmatpush1.xpose.msra.mxu0 0.0
  %215 = vmatprep.subr.mxu0 0.0
  %216 = vmatpush1.xpose.msra.mxu0 0.0
  %217 = vmatprep.subr.mxu0 0.0
  %218 = vmatpush1.xpose.msra.mxu0 %v185
  %219 = vmatprep.subr.mxu0 0.0
  %220 = vmatpush2.xpose.msra.mxu0 0.0
  %221 = vmatprep.subr.mxu0 0.0
  %222 = vmatpush2.xpose.msra.mxu0 0.0
  %223 = vmatprep.subr.mxu0 0.0
  %224 = vmatpush2.xpose.msra.mxu0 0.0
  %225 = vmatprep.subr.mxu0 0.0
  %226 = vmatpush2.xpose.msra.mxu0 0.0
  %227 = vmatprep.subr.mxu0 0.0
  %228 = vmatpush2.xpose.msra.mxu0 0.0
  %229 = vmatprep.subr.mxu0 0.0
  %230 = vmatpush2.xpose.msra.mxu0 0.0
  %231 = vmatprep.subr.mxu0 0.0
  %232 = vmatpush2.xpose.msra.mxu0 0.0
  %233 = vmatprep.subr.mxu0 0.0
  %234 = vmatpush2.xpose.msra.mxu0 0.0
  %235 = vmatprep.subr.mxu0 0.0
  %236 = vmatpush2.xpose.msra.mxu0 0.0
  %237 = vmatprep.subr.mxu0 0.0
  %238 = vmatpush2.xpose.msra.mxu0 0.0
  %239 = vmatprep.subr.mxu0 0.0
  %240 = vmatpush2.xpose.msra.mxu0 0.0
  %241 = vmatprep.subr.mxu0 0.0
  %242 = vmatpush2.xpose.msra.mxu0 0.0
  %243 = vmatprep.subr.mxu0 0.0
  %244 = vmatpush2.xpose.msra.mxu0 0.0
  %245 = vmatprep.subr.mxu0 0.0
  %246 = vmatpush2.xpose.msra.mxu0 0.0
  %247 = vmatprep.subr.mxu0 0.0
  %248 = vmatpush2.xpose.msra.mxu0 0.0
  %249 = vmatprep.subr.mxu0 0.0
  %250 = vmatpush2.xpose.msra.mxu0 0.0
  %251 = vmatprep.mubr.f32.mxu0 0.0
  %252 = vmatmul.mubr.f32.gmra.mxu0 %v186
  %v253 = vpop.f32.mrf.mxu0
  %v254 = vadd.f32 0.0, %v253
  %v255 = vpop.f32.mrf.mxu0
  %256 = vdwg.mxu0
  %v257 = vld [vmem:[%s4 + $0x1] sm:$0x1]
  %258 = vmatprep.subr.mxu0 0.0
  %259 = vmatpush1.xpose.msra.mxu0 0.0
  %260 = vmatprep.subr.mxu0 0.0
  %261 = vmatpush1.xpose.msra.mxu0 0.0
  %262 = vmatprep.subr.mxu0 0.0
  %263 = vmatpush1.xpose.msra.mxu0 0.0
  %264 = vmatprep.subr.mxu0 0.0
  %265 = vmatpush1.xpose.msra.mxu0 0.0
  %266 = vmatprep.subr.mxu0 0.0
  %267 = vmatpush1.xpose.msra.mxu0 0.0
  %268 = vmatprep.subr.mxu0 0.0
  %269 = vmatpush1.xpose.msra.mxu0 0.0
  %270 = vmatprep.subr.mxu0 0.0
  %271 = vmatpush1.xpose.msra.mxu0 0.0
  %272 = vmatprep.subr.mxu0 0.0
  %273 = vmatpush1.xpose.msra.mxu0 0.0
  %274 = vmatprep.subr.mxu0 0.0
  %275 = vmatpush1.xpose.msra.mxu0 0.0
  %276 = vmatprep.subr.mxu0 0.0
  %277 = vmatpush1.xpose.msra.mxu0 0.0
  %278 = vmatprep.subr.mxu0 0.0
  %279 = vmatpush1.xpose.msra.mxu0 0.0
  %280 = vmatprep.subr.mxu0 0.0
  %281 = vmatpush1.xpose.msra.mxu0 0.0
  %282 = vmatprep.subr.mxu0 0.0
  %283 = vmatpush1.xpose.msra.mxu0 0.0
  %284 = vmatprep.subr.mxu0 0.0
  %285 = vmatpush1.xpose.msra.mxu0 0.0
  %286 = vmatprep.subr.mxu0 0.0
  %287 = vmatpush1.xpose.msra.mxu0 0.0
  %288 = vmatprep.subr.mxu0 0.0
  %289 = vmatpush1.xpose.msra.mxu0 %v182
  %290 = vmatprep.subr.mxu0 0.0
  %291 = vmatpush2.xpose.msra.mxu0 0.0
  %292 = vmatprep.subr.mxu0 0.0
  %293 = vmatpush2.xpose.msra.mxu0 0.0
  %294 = vmatprep.subr.mxu0 0.0
  %295 = vmatpush2.xpose.msra.mxu0 0.0
  %296 = vmatprep.subr.mxu0 0.0
  %297 = vmatpush2.xpose.msra.mxu0 0.0
  %298 = vmatprep.subr.mxu0 0.0
  %299 = vmatpush2.xpose.msra.mxu0 0.0
  %300 = vmatprep.subr.mxu0 0.0
  %301 = vmatpush2.xpose.msra.mxu0 0.0
  %302 = vmatprep.subr.mxu0 0.0
  %303 = vmatpush2.xpose.msra.mxu0 0.0
  %304 = vmatprep.subr.mxu0 0.0
  %305 = vmatpush2.xpose.msra.mxu0 0.0
  %306 = vmatprep.subr.mxu0 0.0
  %307 = vmatpush2.xpose.msra.mxu0 0.0
  %308 = vmatprep.subr.mxu0 0.0
  %309 = vmatpush2.xpose.msra.mxu0 0.0
  %310 = vmatprep.subr.mxu0 0.0
  %311 = vmatpush2.xpose.msra.mxu0 0.0
  %312 = vmatprep.subr.mxu0 0.0
  %313 = vmatpush2.xpose.msra.mxu0 0.0
  %314 = vmatprep.subr.mxu0 0.0
  %315 = vmatpush2.xpose.msra.mxu0 0.0
  %316 = vmatprep.subr.mxu0 0.0
  %317 = vmatpush2.xpose.msra.mxu0 0.0
  %318 = vmatprep.subr.mxu0 0.0
  %319 = vmatpush2.xpose.msra.mxu0 0.0
  %320 = vmatprep.subr.mxu0 0.0
  %321 = vmatpush2.xpose.msra.mxu0 0.0
  %322 = vmatprep.mubr.f32.mxu0 0.0
  %323 = vmatmul.mubr.f32.gmra.mxu0 %v257
  %v324 = vpop.f32.mrf.mxu0
  %v325 = vadd.f32 0.0, %v324
  %v326 = vpop.f32.mrf.mxu0
  %327 = vdwg.mxu0
  %v328 = vsub.f32 %v254, %v325
  %s329 = sld [smem:[#allocation2]]
  %v330 = vstv %s329
  %v331 = vadd.f32 %v328, %v330
  %vm332 = vcmask 57344
  %333 = vst.msk [vmem:[%s6] sm:$0x1] %vm332, %v331
  // Predicated region
  $region26: #{critic_forward.1} parent=0 // pred_check
    _
  $region27: #{critic_forward.1} parent=0 // pred_check_branch
    %335 = sbr.rel (0) target = $region29
  $region28: #{critic_forward.1} parent=0 // pred_region
    _
  $region29: #{critic_forward.1} parent=0 // pred_fallthru
    _
  // Predicated region
  $region30: #{critic_forward.1} parent=0 // pred_check
    _
  $region31: #{critic_forward.1} parent=0 // pred_check_branch
    %337 = sbr.rel (0) target = $region33
  $region32: #{critic_forward.1} parent=0 // pred_region
    _
  $region33: #{critic_forward.1} parent=0 // pred_fallthru
    _

</llo_original>
